<compile_context>
chip_gen: v7x
topology: tpu7x:2x2x1
jax: 0.10.0
libtpu: 0.0.40
codegen_flags: <defaults>
</compile_context>

<pallas_src>
import jax
import jax.numpy as jnp
from jax.experimental import pallas as pl
from jax.experimental.pallas import tpu as pltpu

P_X = 0.1                                   # dropout prob on x
P_Y = 0.3                                   # dropout prob on y1
SCALE_X = 1.0 / (1.0 - P_X)                 # inverted-dropout scale
LANES = 128
# integer dropout threshold: drop an element iff bits < DROP_THRESH_U32
DROP_THRESH_U32 = int(round(P_X * (1 << 32)))   # 429496730 -> keep prob ~0.9


def _dropout_affine_kernel(y5_ref, x_ref, bits_ref, o_ref):
    # y5_ref  : SMEM f32[1]       scalar added to every output element
    # x_ref   : VMEM f32[R, 128]
    # bits_ref: VMEM u32[R, 128]  uniform random bits for the dropout mask
    # o_ref   : VMEM f32[R, 128]
    y5 = y5_ref[0]
    keep = bits_ref[...] >= jnp.uint32(DROP_THRESH_U32)
    # z2 = 5 * dropout(x, 0.1) + y5 == where(keep, x * 5/(1-p), 0) + y5
    o_ref[...] = jnp.where(keep, x_ref[...] * (5.0 * SCALE_X), 0.0) + y5


def _pallas_dropout_affine(x2d, bits, y5):
    R, C = x2d.shape
    return pl.pallas_call(
        _dropout_affine_kernel,
        out_shape=jax.ShapeDtypeStruct((R, C), jnp.float32),
        in_specs=[
            pl.BlockSpec(memory_space=pltpu.MemorySpace.SMEM),  # y5 (1,)
            pl.BlockSpec(memory_space=pltpu.MemorySpace.VMEM),  # x2d
            pl.BlockSpec(memory_space=pltpu.MemorySpace.VMEM),  # bits
        ],
        out_specs=pl.BlockSpec(memory_space=pltpu.MemorySpace.VMEM),
    )(y5, x2d, bits)


@jax.jit
def model_forward(x, key):
    """JAX/Pallas equivalent of the PyTorch module's forward pass (training mode)."""
    k_y1, k_y2, k_dy, k_bits = jax.random.split(key, 4)

    # ---- scalar glue (plain JAX, fused under the same jit) ----
    y1 = jax.random.normal(k_y1, (1,), dtype=jnp.float32)
    y2 = jax.random.normal(k_y2, (1,), dtype=jnp.float32)
    keep_y = (jax.random.uniform(k_dy, (1,)) >= P_Y).astype(jnp.float32)
    y3 = y1 * keep_y * (1.0 / (1.0 - P_Y))      # Dropout(p=0.3)(y1)
    y4 = y3 * 2.0
    y5 = (y2 + y4).astype(jnp.float32)          # (1,) scalar

    # ---- elementwise hot path (Pallas) ----
    x2d = x.reshape(-1, LANES)                  # (16, 128) lane-dense slab
    bits = jax.random.bits(k_bits, x2d.shape, dtype=jnp.uint32)
    out2d = _pallas_dropout_affine(x2d, bits, y5)
    return out2d.reshape(x.shape)


if __name__ == "__main__":
    key = jax.random.PRNGKey(0)
    k_x, k_model = jax.random.split(key)
    # NCHW input: (2, 4, 16, 16) -> 2048 f32 elems = one (16, 128) slab
    x = jax.random.normal(k_x, (2, 4, 16, 16), dtype=jnp.float32)

    z2 = model_forward(x, k_model)
    jax.block_until_ready(z2)

    assert z2.shape == x.shape and z2.dtype == jnp.float32
    print("KERNEL_OK")
</pallas_src>

<mosaic_0001>
module attributes {stable_mosaic.version = 11 : i64} {
  func.func @_dropout_affine_kernel(%arg0: memref<1xf32, #tpu.memory_space<smem>>, %arg1: memref<16x128xf32, #tpu.memory_space<vmem>>, %arg2: memref<16x128xi32, #tpu.memory_space<vmem>>, %arg3: memref<16x128xf32, #tpu.memory_space<vmem>>) attributes {dimension_semantics = [], scalar_prefetch = 0 : i64, scratch_operands = 0 : i64, tpu.core_type = #tpu.core_type<tc>} {
    %c0 = arith.constant 0 : index
    %0 = memref.load %arg0[%c0] : memref<1xf32, #tpu.memory_space<smem>>
    %c0_0 = arith.constant 0 : index
    %c0_1 = arith.constant 0 : index
    %1 = vector.load %arg2[%c0_0, %c0_1] : memref<16x128xi32, #tpu.memory_space<vmem>>, vector<16x128xi32>
    %c429496730_i32 = arith.constant 429496730 : i32
    %2 = vector.broadcast %c429496730_i32 : i32 to vector<16x128xi32>
    %3 = arith.cmpi uge, %1, %2 : vector<16x128xi32>
    %c0_2 = arith.constant 0 : index
    %c0_3 = arith.constant 0 : index
    %4 = vector.load %arg1[%c0_2, %c0_3] : memref<16x128xf32, #tpu.memory_space<vmem>>, vector<16x128xf32>
    %cst = arith.constant 5.55555534 : f32
    %5 = vector.broadcast %cst : f32 to vector<16x128xf32>
    %6 = arith.mulf %4, %5 : vector<16x128xf32>
    %cst_4 = arith.constant 0.000000e+00 : f32
    %7 = vector.broadcast %cst_4 : f32 to vector<16x128xf32>
    %8 = arith.select %3, %6, %7 : vector<16x128xi1>, vector<16x128xf32>
    %9 = vector.broadcast %0 : f32 to vector<16x128xf32>
    %10 = arith.addf %8, %9 : vector<16x128xf32>
    %c0_5 = arith.constant 0 : index
    %c0_6 = arith.constant 0 : index
    %11 = vector.load %arg3[%c0_5, %c0_6] : memref<16x128xf32, #tpu.memory_space<vmem>>, vector<16x128xf32>
    tpu.vector_store %arg3[%c0_5, %c0_6], %10 {strides = array<i32>} : memref<16x128xf32, #tpu.memory_space<vmem>>, vector<16x128xf32>,
    return
  }
}

</mosaic_0001>

<llo_original>
// kernel: model_forward.3
$region0: #{model_forward.3}
  #allocation0 [shape = 'u32[]', space=smem, size = 0x4, offset = 0x4, fixed_abs, tag = 'smem constant byte address 0x4 - core index']
  #allocation1 [shape = 'u32[144,128]{1,0:T(1,128)}', space=vmem, size = 0x12000, scoped, tag = 'internal scratch']
  #allocation2 [shape = 'f32[1]{0:T(128)S(6)}', space=smem, size = 0x200, scoped, tag = 'scoped memory for model_forward.3']
  %s0 = inlined_call_operand.<no memory space> [shape: f32[1], index: 0, kind: input, shape index: {}]
  %s1 = inlined_call_operand.vmem [shape: f32[16,128], index: 1, kind: input, shape index: {}]
  %s2 = inlined_call_operand.vmem [shape: u32[16,128], index: 2, kind: input, shape index: {}]
  %s3 = inlined_call_operand.vmem [shape: f32[16,128], index: 3, kind: output, shape index: {}]
  %s4 = sld [smem:[#allocation0]]
  $region22: #{model_forward.3} parent=0
    _
  %s6 = ssub.s32 1, %s4
  %s7 = scalar_select 0, %s6, %s4
  %8 = sst [smem:[#allocation2]] %s0
  // Predicated region
  $region2: #{model_forward.3} parent=0 // pred_check
    _
  $region3: #{model_forward.3} parent=0 // pred_check_branch
    %10 = sbr.rel (0) target = $region5
  $region4: #{model_forward.3} parent=0 // pred_region
    _
  $region5: #{model_forward.3} parent=0 // pred_fallthru
    _
  // Predicated region
  $region6: #{model_forward.3} parent=0 // pred_check
    _
  $region7: #{model_forward.3} parent=0 // pred_check_branch
    %12 = sbr.rel (0) target = $region9
  $region8: #{model_forward.3} parent=0 // pred_region
    _
  $region9: #{model_forward.3} parent=0 // pred_fallthru
    _
  // Predicated region
  $region10: #{model_forward.3} parent=0 // pred_check
    _
  $region11: #{model_forward.3} parent=0 // pred_check_branch
    %14 = sbr.rel (0) target = $region13
  $region12: #{model_forward.3} parent=0 // pred_region
    _
  $region13: #{model_forward.3} parent=0 // pred_fallthru
    _
  %s15 = sld [smem:[#allocation2]]
  %v16 = vld [vmem:[%s2] sm:$0xff]
  %v17 = vld [vmem:[%s2 + $0x8] sm:$0xff]
  %vm18 = vcmp.ge.u32.totalorder %v16, 429496730
  %vm19 = vcmp.ge.u32.totalorder %v17, 429496730
  %v20 = vld [vmem:[%s1] sm:$0xff]
  %v21 = vld [vmem:[%s1 + $0x8] sm:$0xff]
  %v22 = vmul.f32 %v20, 5.5555553
  %v23 = vmul.f32 %v21, 5.5555553
  %v24 = vsel %vm18, %v22, 0.0
  %v25 = vsel %vm19, %v23, 0.0
  %v26 = vstv %s15
  %v27 = vadd.f32 %v24, %v26
  %v28 = vadd.f32 %v25, %v26
  %29 = vst [vmem:[%s3] sm:$0xff] %v27
  %30 = vst [vmem:[%s3 + $0x8] sm:$0xff] %v28
  // Predicated region
  $region14: #{model_forward.3} parent=0 // pred_check
    _
  $region15: #{model_forward.3} parent=0 // pred_check_branch
    %32 = sbr.rel (0) target = $region17
  $region16: #{model_forward.3} parent=0 // pred_region
    _
  $region17: #{model_forward.3} parent=0 // pred_fallthru
    _
  // Predicated region
  $region18: #{model_forward.3} parent=0 // pred_check
    _
  $region19: #{model_forward.3} parent=0 // pred_check_branch
    %34 = sbr.rel (0) target = $region21
  $region20: #{model_forward.3} parent=0 // pred_region
    _
  $region21: #{model_forward.3} parent=0 // pred_fallthru
    _

</llo_original>
